<compile_context>
chip_gen: v7x
topology: tpu7x:2x2x1
jax: 0.10.0
libtpu: 0.0.40
codegen_flags: <defaults>
</compile_context>

<pallas_src>
import jax
import jax.numpy as jnp
from jax.experimental import pallas as pl
from jax.experimental.pallas import tpu as pltpu  # noqa: F401  (kept for TPU-specific params if scaled up)

EPS = 1e-5  # PyTorch BatchNorm1d default eps


def afm_kernel(x_ref, w1_ref, b1_ref, w2_ref, b2_ref, out_ref):
    """Single invocation; all operands resident in VMEM.

    x_ref  : (B, C*dim)         packed activations (branch-major lanes)
    w1_ref : (C*dim, C*inter)   block-diagonal, BN1-folded, pre-transposed
    b1_ref : (1, C*inter)       BN1-folded bias
    w2_ref : (C*inter, C*dim)   block-diagonal, BN2-folded, pre-transposed
    b2_ref : (1, C*dim)         BN2-folded bias
    out_ref: (B, C*dim)         sigmoid(branch outputs), lane-dense
    """
    x = x_ref[...]
    h = jnp.dot(x, w1_ref[...], preferred_element_type=jnp.float32) + b1_ref[...]
    h = jnp.maximum(h, 0.0)                                   # ReLU
    y = jnp.dot(h, w2_ref[...], preferred_element_type=jnp.float32) + b2_ref[...]
    out_ref[...] = jax.nn.sigmoid(y)                          # norm = Sigmoid


# ---------------- wrapper-side parameter preparation ----------------

def _fold_bn(w, b, g, be, m, v):
    """Fold eval-mode BatchNorm1d into the preceding 1x1 conv.

    w: (C, out, in); b/g/be/m/v: (C, 1, out).  Returns folded (w', b').
    """
    scale = g * jax.lax.rsqrt(v + EPS)                        # (C, 1, out)
    w_f = w * jnp.transpose(scale, (0, 2, 1))                 # scale output rows
    b_f = (b - m) * scale + be
    return w_f, b_f


def _block_diag_T(w_f):
    """(C, out, in) -> block-diagonal (C*in, C*out) with block i = w_f[i].T."""
    C, out_c, in_c = w_f.shape
    wT = jnp.transpose(w_f, (0, 2, 1))                        # (C, in, out)
    eye = jnp.eye(C, dtype=w_f.dtype)
    return jnp.einsum("iab,ij->iajb", wT, eye).reshape(C * in_c, C * out_c)


def afm_forward(x_ncl, params):
    """x_ncl: (B, dim, channel) float32.  Returns (B, dim, channel)."""
    B, dim, channel = x_ncl.shape
    inter = params["w1"].shape[1]

    # BN folding + block-diagonal packing (done once, outside the kernel)
    w1f, b1f = _fold_bn(params["w1"], params["b1"], params["g1"],
                        params["be1"], params["m1"], params["v1"])
    w2f, b2f = _fold_bn(params["w2"], params["b2"], params["g2"],
                        params["be2"], params["m2"], params["v2"])
    w1_bd = _block_diag_T(w1f)                                # (C*dim, C*inter)
    w2_bd = _block_diag_T(w2f)                                # (C*inter, C*dim)
    b1_p = b1f.reshape(1, channel * inter)
    b2_p = b2f.reshape(1, channel * dim)

    # branch-major lane packing: (B, dim, C) -> (B, C*dim)
    x_packed = jnp.transpose(x_ncl, (0, 2, 1)).reshape(B, channel * dim)

    # TODO(synk): at production batch sizes add a grid axis over B
    # ("parallel" semantics + explicit vmem_limit_bytes) so v7x's 2 TCs and
    # its 64 MiB VMEM stay happy; for B=2 a single invocation is optimal.
    out_packed = pl.pallas_call(
        afm_kernel,
        out_shape=jax.ShapeDtypeStruct((B, channel * dim), jnp.float32),
    )(x_packed, w1_bd, b1_p, w2_bd, b2_p)

    # (B, C*dim) -> (B, dim, C)
    return jnp.transpose(out_packed.reshape(B, channel, dim), (0, 2, 1))


# ---------------- pure-JAX reference (unfolded BN) ----------------

def afm_reference(x_ncl, params):
    B, dim, channel = x_ncl.shape
    outs = []
    for i in range(channel):
        xi = x_ncl[:, :, i]                                   # (B, dim)
        h = xi @ params["w1"][i].T + params["b1"][i, 0]
        h = params["g1"][i, 0] * (h - params["m1"][i, 0]) / jnp.sqrt(params["v1"][i, 0] + EPS) + params["be1"][i, 0]
        h = jnp.maximum(h, 0.0)
        y = h @ params["w2"][i].T + params["b2"][i, 0]
        y = params["g2"][i, 0] * (y - params["m2"][i, 0]) / jnp.sqrt(params["v2"][i, 0] + EPS) + params["be2"][i, 0]
        outs.append(y[:, :, None])
    return jax.nn.sigmoid(jnp.concatenate(outs, axis=-1))


def make_params(key, channel, dim, inter):
    """Deterministic synthetic parameters (shapes follow the PyTorch module)."""
    ks = jax.random.split(key, 10)
    bound1 = 1.0 / jnp.sqrt(dim)      # Conv1d default init bound (fan_in = dim * k)
    bound2 = 1.0 / jnp.sqrt(inter)
    return {
        # Conv1d(dim, inter, k=1): weight (inter, dim, 1) -> squeezed (inter, dim)
        "w1": jax.random.uniform(ks[0], (channel, inter, dim), jnp.float32, -bound1, bound1),
        "b1": jax.random.uniform(ks[1], (channel, 1, inter), jnp.float32, -bound1, bound1),
        # BatchNorm1d(inter) eval-mode params / running stats
        "g1": 1.0 + 0.1 * jax.random.normal(ks[2], (channel, 1, inter), jnp.float32),
        "be1": 0.1 * jax.random.normal(ks[3], (channel, 1, inter), jnp.float32),
        "m1": 0.05 * jax.random.normal(ks[4], (channel, 1, inter), jnp.float32),
        "v1": 1.0 + 0.1 * jax.random.uniform(ks[5], (channel, 1, inter), jnp.float32),
        # Conv1d(inter, dim, k=1)
        "w2": jax.random.uniform(ks[6], (channel, dim, inter), jnp.float32, -bound2, bound2),
        "b2": jax.random.uniform(ks[7], (channel, 1, dim), jnp.float32, -bound2, bound2),
        # BatchNorm1d(dim)
        "g2": 1.0 + 0.1 * jax.random.normal(ks[8], (channel, 1, dim), jnp.float32),
        "be2": 0.1 * jax.random.normal(ks[9], (channel, 1, dim), jnp.float32),
        "m2": jnp.zeros((channel, 1, dim), jnp.float32),
        "v2": jnp.ones((channel, 1, dim), jnp.float32),
    }


if __name__ == "__main__":
    # Small shapes consistent with the module: x is (B, dim, channel)
    B, dim, channel, r = 2, 32, 4, 4
    inter = dim // r

    key = jax.random.PRNGKey(0)
    k_x, k_p = jax.random.split(key)
    x = jax.random.normal(k_x, (B, dim, channel), jnp.float32)
    params = make_params(k_p, channel, dim, inter)

    out = afm_forward(x, params)
    out = jax.block_until_ready(out)

    ref = afm_reference(x, params)
    assert out.shape == (B, dim, channel)
    assert jnp.allclose(out, ref, atol=1e-5, rtol=1e-5), "mismatch vs reference"

    # TODO(synk): norm='softmax' variant (Softmax over the channel axis) is not
    # implemented; only the default sigmoid norm is covered.
    print("KERNEL_OK")
</pallas_src>

<mosaic_0001>
module attributes {stable_mosaic.version = 11 : i64} {
  func.func @afm_kernel(%arg0: memref<2x128xf32, #tpu.memory_space<vmem>>, %arg1: memref<128x32xf32, #tpu.memory_space<vmem>>, %arg2: memref<1x32xf32, #tpu.memory_space<vmem>>, %arg3: memref<32x128xf32, #tpu.memory_space<vmem>>, %arg4: memref<1x128xf32, #tpu.memory_space<vmem>>, %arg5: memref<2x128xf32, #tpu.memory_space<vmem>>) attributes {dimension_semantics = [], scalar_prefetch = 0 : i64, scratch_operands = 0 : i64, tpu.core_type = #tpu.core_type<tc>} {
    %c0 = arith.constant 0 : index
    %c0_0 = arith.constant 0 : index
    %0 = vector.load %arg0[%c0, %c0_0] : memref<2x128xf32, #tpu.memory_space<vmem>>, vector<2x128xf32>
    %c0_1 = arith.constant 0 : index
    %c0_2 = arith.constant 0 : index
    %1 = vector.load %arg1[%c0_1, %c0_2] : memref<128x32xf32, #tpu.memory_space<vmem>>, vector<128x32xf32>
    %cst = arith.constant dense<0.000000e+00> : vector<2x32xf32>
    %2 = tpu.matmul %0, %1, %cst {dimension_numbers = #tpu.dot_dimension_numbers<[1], [0], [0], [1], [0, 0, 1, 1], [], []>} : vector<2x128xf32>, vector<128x32xf32>, vector<2x32xf32> -> vector<2x32xf32>
    %c0_3 = arith.constant 0 : index
    %c0_4 = arith.constant 0 : index
    %3 = vector.load %arg2[%c0_3, %c0_4] : memref<1x32xf32, #tpu.memory_space<vmem>>, vector<1x32xf32>
    %4 = vector.broadcast %3 : vector<1x32xf32> to vector<2x32xf32>
    %5 = arith.addf %2, %4 : vector<2x32xf32>
    %cst_5 = arith.constant 0.000000e+00 : f32
    %6 = vector.broadcast %cst_5 : f32 to vector<2x32xf32>
    %7 = arith.maximumf %5, %6 : vector<2x32xf32>
    %c0_6 = arith.constant 0 : index
    %c0_7 = arith.constant 0 : index
    %8 = vector.load %arg3[%c0_6, %c0_7] : memref<32x128xf32, #tpu.memory_space<vmem>>, vector<32x128xf32>
    %cst_8 = arith.constant dense<0.000000e+00> : vector<2x128xf32>
    %9 = tpu.matmul %7, %8, %cst_8 {dimension_numbers = #tpu.dot_dimension_numbers<[1], [0], [0], [1], [0, 0, 1, 1], [], []>} : vector<2x32xf32>, vector<32x128xf32>, vector<2x128xf32> -> vector<2x128xf32>
    %c0_9 = arith.constant 0 : index
    %c0_10 = arith.constant 0 : index
    %10 = vector.load %arg4[%c0_9, %c0_10] : memref<1x128xf32, #tpu.memory_space<vmem>>, vector<1x128xf32>
    %11 = vector.broadcast %10 : vector<1x128xf32> to vector<2x128xf32>
    %12 = arith.addf %9, %11 : vector<2x128xf32>
    %13 = arith.negf %12 : vector<2x128xf32>
    %14 = math.exp %13 : vector<2x128xf32>
    %cst_11 = arith.constant 1.000000e+00 : f32
    %15 = vector.broadcast %cst_11 : f32 to vector<2x128xf32>
    %16 = arith.addf %15, %14 : vector<2x128xf32>
    %17 = arith.divf %15, %16 : vector<2x128xf32>
    %c0_12 = arith.constant 0 : index
    %c0_13 = arith.constant 0 : index
    %18 = vector.load %arg5[%c0_12, %c0_13] : memref<2x128xf32, #tpu.memory_space<vmem>>, vector<2x128xf32>
    tpu.vector_store %arg5[%c0_12, %c0_13], %17 {strides = array<i32>} : memref<2x128xf32, #tpu.memory_space<vmem>>, vector<2x128xf32>,
    return
  }
}

</mosaic_0001>

<llo_original>
// kernel: tpu_custom_call.1
$region0: #{tpu_custom_call.1}
  #allocation0 [shape = 'u32[]', space=smem, size = 0x4, offset = 0x4, fixed_abs, tag = 'smem constant byte address 0x4 - core index']
  #allocation1 [shape = 'u32[144,128]{1,0:T(1,128)}', space=vmem, size = 0x12000, scoped, tag = 'internal scratch']
  %s0 = inlined_call_operand.vmem [shape: f32[2,128], index: 0, kind: input, shape index: {}]
  %s1 = inlined_call_operand.vmem [shape: f32[128,32], index: 1, kind: input, shape index: {}]
  %s2 = inlined_call_operand.vmem [shape: f32[1,32], index: 2, kind: input, shape index: {}]
  %s3 = inlined_call_operand.vmem [shape: f32[32,128], index: 3, kind: input, shape index: {}]
  %s4 = inlined_call_operand.vmem [shape: f32[1,128], index: 4, kind: input, shape index: {}]
  %s5 = inlined_call_operand.hbm [shape: f32[2,128], index: 5, kind: output, shape index: {}]
  %s6 = sld [smem:[#allocation0]]
  $region30: #{tpu_custom_call.1} parent=0
    _
  %s8 = ssub.s32 1, %s6
  %s9 = scalar_select 0, %s8, %s6
  $region1: #{tpu_custom_call.1} parent=0
    #allocation2 [shape = 'u8[1024]{0}', space=vmem, size = 0x400, scoped, tag = 'output window, operand 0, single buffered']
    #allocation3 [shape = 's32[1]{0}', space=sflag, size = 0x4, scoped, tag = 'scoped memory for tpu_custom_call.1']
    %10 = vsyncpa [#allocation3], 0
    // Predicated region
    $region2: #{tpu_custom_call.1} parent=1 // pred_check
      _
    $region3: #{tpu_custom_call.1} parent=1 // pred_check_branch
      %12 = sbr.rel (0) target = $region5
    $region4: #{tpu_custom_call.1} parent=1 // pred_region
      _
    $region5: #{tpu_custom_call.1} parent=1 // pred_fallthru
      _
    // Predicated region
    $region6: #{tpu_custom_call.1} parent=1 // pred_check
      _
    $region7: #{tpu_custom_call.1} parent=1 // pred_check_branch
      %14 = sbr.rel (0) target = $region9
    $region8: #{tpu_custom_call.1} parent=1 // pred_region
      _
    $region9: #{tpu_custom_call.1} parent=1 // pred_fallthru
      _
    // Predicated region
    $region10: #{tpu_custom_call.1} parent=1 // pred_check
      _
    $region11: #{tpu_custom_call.1} parent=1 // pred_check_branch
      %16 = sbr.rel (0) target = $region13
    $region12: #{tpu_custom_call.1} parent=1 // pred_region
      _
    $region13: #{tpu_custom_call.1} parent=1 // pred_fallthru
      _
    // Predicated region
    $region14: #{tpu_custom_call.1} parent=1 // pred_check
      _
    $region15: #{tpu_custom_call.1} parent=1 // pred_check_branch
      %18 = sbr.rel (0) target = $region17
    $region16: #{tpu_custom_call.1} parent=1 // pred_region
      _
    $region17: #{tpu_custom_call.1} parent=1 // pred_fallthru
      _
    // Predicated region
    $region18: #{tpu_custom_call.1} parent=1 // pred_check
      _
    $region19: #{tpu_custom_call.1} parent=1 // pred_check_branch
      %20 = sbr.rel (0) target = $region21
    $region20: #{tpu_custom_call.1} parent=1 // pred_region
      _
    $region21: #{tpu_custom_call.1} parent=1 // pred_fallthru
      _
    %v21 = vld [vmem:[%s0] sm:$0x3]
    %v22 = vld [vmem:[%s1] sm:$0xff]
    %v23 = vld [vmem:[%s1 + $0x8] sm:$0xff]
    %v24 = vld [vmem:[%s1 + $0x10] sm:$0xff]
    %v25 = vld [vmem:[%s1 + $0x18] sm:$0xff]
    %v26 = vld [vmem:[%s1 + $0x20] sm:$0xff]
    %v27 = vld [vmem:[%s1 + $0x28] sm:$0xff]
    %v28 = vld [vmem:[%s1 + $0x30] sm:$0xff]
    %v29 = vld [vmem:[%s1 + $0x38] sm:$0xff]
    %v30 = vld [vmem:[%s1 + $0x40] sm:$0xff]
    %v31 = vld [vmem:[%s1 + $0x48] sm:$0xff]
    %v32 = vld [vmem:[%s1 + $0x50] sm:$0xff]
    %v33 = vld [vmem:[%s1 + $0x58] sm:$0xff]
    %v34 = vld [vmem:[%s1 + $0x60] sm:$0xff]
    %v35 = vld [vmem:[%s1 + $0x68] sm:$0xff]
    %v36 = vld [vmem:[%s1 + $0x70] sm:$0xff]
    %v37 = vld [vmem:[%s1 + $0x78] sm:$0xff]
    %v38 = vld [vmem:[%s2] sm:$0x1]
    %v40 = vlaneseq
    %v41 = vshrl.u32 %v40, 7
    %v42 = vsub.s32 0, %v41
    %v43 = vrot.slane %v38, %v42
    %45 = vmatprep.subr.mxu0 0.0
    %46 = vmatpush1.msra.mxu0 %v22
    %47 = vmatprep.subr.mxu0 0.0
    %48 = vmatpush1.msra.mxu0 %v23
    %49 = vmatprep.subr.mxu0 0.0
    %50 = vmatpush1.msra.mxu0 %v24
    %51 = vmatprep.subr.mxu0 0.0
    %52 = vmatpush1.msra.mxu0 %v25
    %53 = vmatprep.subr.mxu0 0.0
    %54 = vmatpush1.msra.mxu0 %v26
    %55 = vmatprep.subr.mxu0 0.0
    %56 = vmatpush1.msra.mxu0 %v27
    %57 = vmatprep.subr.mxu0 0.0
    %58 = vmatpush1.msra.mxu0 %v28
    %59 = vmatprep.subr.mxu0 0.0
    %60 = vmatpush1.msra.mxu0 %v29
    %61 = vmatprep.subr.mxu0 0.0
    %62 = vmatpush1.msra.mxu0 %v30
    %63 = vmatprep.subr.mxu0 0.0
    %64 = vmatpush1.msra.mxu0 %v31
    %65 = vmatprep.subr.mxu0 0.0
    %66 = vmatpush1.msra.mxu0 %v32
    %67 = vmatprep.subr.mxu0 0.0
    %68 = vmatpush1.msra.mxu0 %v33
    %69 = vmatprep.subr.mxu0 0.0
    %70 = vmatpush1.msra.mxu0 %v34
    %71 = vmatprep.subr.mxu0 0.0
    %72 = vmatpush1.msra.mxu0 %v35
    %73 = vmatprep.subr.mxu0 0.0
    %74 = vmatpush1.msra.mxu0 %v36
    %75 = vmatprep.subr.mxu0 0.0
    %76 = vmatpush1.msra.mxu0 %v37
    %77 = vmatprep.subr.mxu0 0.0
    %78 = vmatpush1.msra.mxu0 0.0
    %79 = vmatprep.subr.mxu0 0.0
    %80 = vmatpush1.msra.mxu0 0.0
    %81 = vmatprep.subr.mxu0 0.0
    %82 = vmatpush1.msra.mxu0 0.0
    %83 = vmatprep.subr.mxu0 0.0
    %84 = vmatpush1.msra.mxu0 0.0
    %85 = vmatprep.subr.mxu0 0.0
    %86 = vmatpush1.msra.mxu0 0.0
    %87 = vmatprep.subr.mxu0 0.0
    %88 = vmatpush1.msra.mxu0 0.0
    %89 = vmatprep.subr.mxu0 0.0
    %90 = vmatpush1.msra.mxu0 0.0
    %91 = vmatprep.subr.mxu0 0.0
    %92 = vmatpush1.msra.mxu0 0.0
    %93 = vmatprep.subr.mxu0 0.0
    %94 = vmatpush1.msra.mxu0 0.0
    %95 = vmatprep.subr.mxu0 0.0
    %96 = vmatpush1.msra.mxu0 0.0
    %97 = vmatprep.subr.mxu0 0.0
    %98 = vmatpush1.msra.mxu0 0.0
    %99 = vmatprep.subr.mxu0 0.0
    %100 = vmatpush1.msra.mxu0 0.0
    %101 = vmatprep.subr.mxu0 0.0
    %102 = vmatpush1.msra.mxu0 0.0
    %103 = vmatprep.subr.mxu0 0.0
    %104 = vmatpush1.msra.mxu0 0.0
    %105 = vmatprep.subr.mxu0 0.0
    %106 = vmatpush1.msra.mxu0 0.0
    %107 = vmatprep.subr.mxu0 0.0
    %108 = vmatpush1.msra.mxu0 0.0
    %109 = vmatprep.mubr.f32.mxu0 0.0
    %110 = vmatmul.mubr.f32.gmra.mrb[0].mxu0 %v21
    %v111 = vpop.f32.mrb[0].mxu0
    %v112 = vadd.f32 %v43, %v111
    %v113 = vpop.f32.mrb[0].mxu0
    %114 = vdwg.mxu0
    %v115 = vmax.f32 %v112, 0.0
    %v116 = vld [vmem:[%s3] sm:$0xff]
    %v117 = vld [vmem:[%s3 + $0x8] sm:$0xff]
    %v118 = vld [vmem:[%s3 + $0x10] sm:$0xff]
    %v119 = vld [vmem:[%s3 + $0x18] sm:$0xff]
    %v120 = vld [vmem:[%s4] sm:$0x1]
    %v122 = vlaneseq
    %v123 = vshrl.u32 %v122, 7
    %v124 = vsub.s32 0, %v123
    %v125 = vrot.slane %v120, %v124
    %vm127 = vcmask 261120
    %v129 = vsel %vm127, %v115, 0
    %131 = vmatprep.subr.mxu0 0.0
    %132 = vmatpush1.msra.mxu0 %v116
    %133 = vmatprep.subr.mxu0 0.0
    %134 = vmatpush1.msra.mxu0 %v117
    %135 = vmatprep.subr.mxu0 0.0
    %136 = vmatpush1.msra.mxu0 %v118
    %137 = vmatprep.subr.mxu0 0.0
    %138 = vmatpush1.msra.mxu0 %v119
    %139 = vmatprep.subr.mxu0 0.0
    %140 = vmatpush1.msra.mxu0 0.0
    %141 = vmatprep.subr.mxu0 0.0
    %142 = vmatpush1.msra.mxu0 0.0
    %143 = vmatprep.subr.mxu0 0.0
    %144 = vmatpush1.msra.mxu0 0.0
    %145 = vmatprep.subr.mxu0 0.0
    %146 = vmatpush1.msra.mxu0 0.0
    %147 = vmatprep.subr.mxu0 0.0
    %148 = vmatpush1.msra.mxu0 0.0
    %149 = vmatprep.subr.mxu0 0.0
    %150 = vmatpush1.msra.mxu0 0.0
    %151 = vmatprep.subr.mxu0 0.0
    %152 = vmatpush1.msra.mxu0 0.0
    %153 = vmatprep.subr.mxu0 0.0
    %154 = vmatpush1.msra.mxu0 0.0
    %155 = vmatprep.subr.mxu0 0.0
    %156 = vmatpush1.msra.mxu0 0.0
    %157 = vmatprep.subr.mxu0 0.0
    %158 = vmatpush1.msra.mxu0 0.0
    %159 = vmatprep.subr.mxu0 0.0
    %160 = vmatpush1.msra.mxu0 0.0
    %161 = vmatprep.subr.mxu0 0.0
    %162 = vmatpush1.msra.mxu0 0.0
    %163 = vmatprep.subr.mxu0 0.0
    %164 = vmatpush1.msra.mxu0 0.0
    %165 = vmatprep.subr.mxu0 0.0
    %166 = vmatpush1.msra.mxu0 0.0
    %167 = vmatprep.subr.mxu0 0.0
    %168 = vmatpush1.msra.mxu0 0.0
    %169 = vmatprep.subr.mxu0 0.0
    %170 = vmatpush1.msra.mxu0 0.0
    %171 = vmatprep.subr.mxu0 0.0
    %172 = vmatpush1.msra.mxu0 0.0
    %173 = vmatprep.subr.mxu0 0.0
    %174 = vmatpush1.msra.mxu0 0.0
    %175 = vmatprep.subr.mxu0 0.0
    %176 = vmatpush1.msra.mxu0 0.0
    %177 = vmatprep.subr.mxu0 0.0
    %178 = vmatpush1.msra.mxu0 0.0
    %179 = vmatprep.subr.mxu0 0.0
    %180 = vmatpush1.msra.mxu0 0.0
    %181 = vmatprep.subr.mxu0 0.0
    %182 = vmatpush1.msra.mxu0 0.0
    %183 = vmatprep.subr.mxu0 0.0
    %184 = vmatpush1.msra.mxu0 0.0
    %185 = vmatprep.subr.mxu0 0.0
    %186 = vmatpush1.msra.mxu0 0.0
    %187 = vmatprep.subr.mxu0 0.0
    %188 = vmatpush1.msra.mxu0 0.0
    %189 = vmatprep.subr.mxu0 0.0
    %190 = vmatpush1.msra.mxu0 0.0
    %191 = vmatprep.subr.mxu0 0.0
    %192 = vmatpush1.msra.mxu0 0.0
    %193 = vmatprep.subr.mxu0 0.0
    %194 = vmatpush1.msra.mxu0 0.0
    %195 = vmatprep.mubr.f32.mxu0 0.0
    %196 = vmatmul.mubr.f32.gmra.mrb[0].mxu0 %v129
    %v197 = vpop.f32.mrb[0].mxu0
    %v198 = vadd.f32 %v125, %v197
    %v199 = vpop.f32.mrb[0].mxu0
    %200 = vdwg.mxu0
    %v201 = vxor.u32 %v198, 2147483648
    %v202 = vmul.f32 %v201, 1.442695
    %v203 = vpow.pop %v202
    %v204 = vadd.f32 %v203, 1.0
    %v205 = vrcp.pop %v204
    %v206 = vmul.f32 1.0, %v205
    %207 = vst [vmem:[#allocation2] sm:$0x3] %v206
    // Predicated region
    $region22: #{tpu_custom_call.1} parent=1 // pred_check
      _
    $region23: #{tpu_custom_call.1} parent=1 // pred_check_branch
      %209 = sbr.rel (0) target = $region25
    $region24: #{tpu_custom_call.1} parent=1 // pred_region
      %s211 = ssub.s32 32, 32
      %212 = vsyncadd [#allocation3], %s211
      %s214 = sshll.u32 [#allocation2], 4
      %s215 = int_to_ptr.vmem [resolvable:$true] %s214
      %217 = dma.vmem_to_hbm [thread:$0]  %s215, 32, %s5, [#allocation3]
    $region25: #{tpu_custom_call.1} parent=1 // pred_fallthru
      _
    // Predicated region
    $region26: #{tpu_custom_call.1} parent=1 // pred_check
      _
    $region27: #{tpu_custom_call.1} parent=1 // pred_check_branch
      %219 = sbr.rel (0) target = $region29
    $region28: #{tpu_custom_call.1} parent=1 // pred_region
      %220 = dma.done [#allocation3], 32
    $region29: #{tpu_custom_call.1} parent=1 // pred_fallthru
      _
    %221 = vsyncpa [#allocation3], 1

</llo_original>
